<compile_context>
chip_gen: v7x
topology: tpu7x:2x2x1
jax: 0.10.0
libtpu: 0.0.40
codegen_flags: <defaults>
</compile_context>

<pallas_src>
import jax
import jax.numpy as jnp
from jax.experimental import pallas as pl
from jax.experimental.pallas import tpu as pltpu


def _round_up(x, m):
    return ((x + m - 1) // m) * m


def _choose_tk(CHW, D_pad, target_w_tile_bytes):
    """Contraction tile so one streamed W tile is ~target bytes (mult. of 256)."""
    tk = target_w_tile_bytes // (D_pad * 2)          # bf16 weights
    tk = max(256, (tk // 256) * 256)
    tk = min(tk, _round_up(CHW, 256))
    return tk


# --------------------------------------------------------------------------
# Kernel
# --------------------------------------------------------------------------
def custom_clip_kernel(x_ref, w_ref, cen_ref, out_ref, acc_ref):
    # x_ref   : VMEM (B_pad, CHW_pad)  bf16  resident flattened image
    # w_ref   : VMEM (tk, D_pad)       bf16  streamed encoder-weight tile
    # cen_ref : VMEM (D_pad, K_pad)    bf16  exp(scale) * normalized centers^T
    # out_ref : VMEM (B_pad, K_pad)    f32   logits
    # acc_ref : VMEM (B_pad, D_pad)    f32   image-feature accumulator
    k = pl.program_id(0)
    tk = w_ref.shape[0]

    @pl.when(k == 0)
    def _init():
        acc_ref[...] = jnp.zeros_like(acc_ref)

    # ---- image_encoder hot path: bf16 MXU matmul, f32 accumulation ----
    off = pl.multiple_of(k * tk, 256)
    x_chunk = x_ref[:, pl.ds(off, tk)]
    acc_ref[...] += jnp.dot(x_chunk, w_ref[...],
                            preferred_element_type=jnp.float32)

    @pl.when(k == pl.num_programs(0) - 1)
    def _finalize():
        feats = acc_ref[...]
        # image_features / image_features.norm(dim=-1, keepdim=True)
        inv = jax.lax.rsqrt(
            jnp.sum(feats * feats, axis=-1, keepdims=True) + 1e-12)
        feats = (feats * inv).astype(cen_ref.dtype)
        # centers are pre-normalized, pre-scaled by exp(logit_scale),
        # pre-transposed and bf16 -> single small MXU matmul.
        out_ref[...] = jnp.dot(feats, cen_ref[...],
                               preferred_element_type=jnp.float32)


# --------------------------------------------------------------------------
# One-time parameter preparation (hoisted out of the forward path)
# --------------------------------------------------------------------------
def prepare_custom_clip(w_enc, class_centers, logit_scale, *,
                        tk=None, target_w_tile_bytes=4 << 20, eps=1e-12):
    """Cast/pad the encoder weight and fold scale into the centers ONCE."""
    CHW, D = w_enc.shape
    K = class_centers.shape[0]
    D_pad = _round_up(D, 128)
    K_pad = _round_up(K, 128)
    if tk is None:
        tk = _choose_tk(CHW, D_pad, target_w_tile_bytes)
    CHW_pad = _round_up(CHW, tk)

    w = w_enc.astype(jnp.bfloat16)
    if (CHW_pad != CHW) or (D_pad != D):
        w = jnp.pad(w, ((0, CHW_pad - CHW), (0, D_pad - D)))

    cents = class_centers.astype(jnp.float32)
    cents = cents / jnp.maximum(
        jnp.linalg.norm(cents, axis=-1, keepdims=True), eps)
    cents = jnp.exp(jnp.asarray(logit_scale, jnp.float32)) * cents
    cen_t = cents.T                                   # (D, K)
    if (D_pad != D) or (K_pad != K):
        cen_t = jnp.pad(cen_t, ((0, D_pad - D), (0, K_pad - K)))
    cen_t = cen_t.astype(jnp.bfloat16)

    meta = dict(CHW=CHW, D=D, K=K,
                CHW_pad=CHW_pad, D_pad=D_pad, K_pad=K_pad, tk=tk)
    return jax.device_put(w), jax.device_put(cen_t), meta


# --------------------------------------------------------------------------
# Forward
# --------------------------------------------------------------------------
def custom_clip_forward(image, w_pad, cen_t, meta):
    """image: (B, C, H, W) NCHW. Returns logits (B, K)."""
    B = image.shape[0]
    CHW, D, K = meta["CHW"], meta["D"], meta["K"]
    CHW_pad, D_pad, K_pad = meta["CHW_pad"], meta["D_pad"], meta["K_pad"]
    tk = meta["tk"]
    B_pad = _round_up(B, 16)          # full bf16 sublane packing for the LHS
    n_k = CHW_pad // tk

    # Per-call layout plumbing on the tiny x only (weights already prepared).
    x = image.reshape(B, CHW).astype(jnp.bfloat16)
    if (B_pad != B) or (CHW_pad != CHW):
        x = jnp.pad(x, ((0, B_pad - B), (0, CHW_pad - CHW)))

    # VMEM budget: double-buffered W stream + resident x / centers / out + acc.
    w_buf = 2 * tk * D_pad * 2
    x_buf = 2 * B_pad * CHW_pad * 2
    cen_buf = 2 * D_pad * K_pad * 2
    out_buf = 2 * B_pad * K_pad * 4
    acc_buf = B_pad * D_pad * 4
    needed = w_buf + x_buf + cen_buf + out_buf + acc_buf
    # Clamp to 48 MiB: safe inside v7x's 64 MiB physical VMEM; v5e/v6e
    # (128 MiB) can raise target_w_tile_bytes instead.
    vmem_limit = int(min(max(needed + (8 << 20), 32 << 20), 48 << 20))

    cost = pl.CostEstimate(
        flops=2 * B_pad * CHW_pad * D_pad + 2 * B_pad * D_pad * K_pad,
        transcendentals=B_pad,
        bytes_accessed=(x.size * 2 + w_pad.size * 2 + cen_t.size * 2
                        + B_pad * K_pad * 4),
    )

    out = pl.pallas_call(
        custom_clip_kernel,
        out_shape=jax.ShapeDtypeStruct((B_pad, K_pad), jnp.float32),
        grid_spec=pltpu.PrefetchScalarGridSpec(
            num_scalar_prefetch=0,
            grid=(n_k,),
            in_specs=[
                # x loaded once, resident for the whole reduction.
                pl.BlockSpec((B_pad, CHW_pad), lambda k: (0, 0)),
                # W_enc streamed along the contraction axis.
                pl.BlockSpec((tk, D_pad), lambda k: (k, 0)),
                # centers^T, constant block (fetched once).
                pl.BlockSpec((D_pad, K_pad), lambda k: (0, 0)),
            ],
            out_specs=pl.BlockSpec((B_pad, K_pad), lambda k: (0, 0)),
            scratch_shapes=[pltpu.VMEM((B_pad, D_pad), jnp.float32)],
        ),
        compiler_params=pltpu.CompilerParams(
            dimension_semantics=("arbitrary",),   # reduction axis
            vmem_limit_bytes=vmem_limit,
        ),
        cost_estimate=cost,
    )(x, w_pad, cen_t)

    return out[:B, :K]


# --------------------------------------------------------------------------
# Pure-JAX reference mirroring the kernel numerics (bf16 MXU inputs)
# --------------------------------------------------------------------------
def reference_forward(image, w_enc, class_centers, logit_scale, eps=1e-12):
    B = image.shape[0]
    x = image.reshape(B, -1).astype(jnp.bfloat16)
    feats = jnp.dot(x, w_enc.astype(jnp.bfloat16),
                    preferred_element_type=jnp.float32)
    feats = feats * jax.lax.rsqrt(
        jnp.sum(feats * feats, axis=-1, keepdims=True) + eps)
    cents = class_centers.astype(jnp.float32)
    cents = cents / jnp.maximum(
        jnp.linalg.norm(cents, axis=-1, keepdims=True), eps)
    cents = (jnp.exp(jnp.asarray(logit_scale, jnp.float32)) * cents
             ).astype(jnp.bfloat16)
    return jnp.dot(feats.astype(jnp.bfloat16), cents.T,
                   preferred_element_type=jnp.float32)


if __name__ == "__main__":
    key = jax.random.PRNGKey(0)
    k_img, k_w, k_c = jax.random.split(key, 3)

    B, C, H, W = 2, 4, 16, 16       # small NCHW image (CHW = 1024)
    D = 32                          # feature / embedding dim
    K = 8                           # number of classes (class centers)

    image = jax.random.normal(k_img, (B, C, H, W), dtype=jnp.float32)
    w_enc = jax.random.normal(k_w, (C * H * W, D), dtype=jnp.float32) * 0.02
    class_centers = jax.random.normal(k_c, (K, D), dtype=jnp.float32)
    logit_scale = jnp.log(jnp.float32(100.0))   # CLIP-style: exp() == 100

    # One-time prep (hoisted weight cast/pad + center normalization/scale).
    w_pad, cen_t, meta = prepare_custom_clip(w_enc, class_centers, logit_scale)

    logits = custom_clip_forward(image, w_pad, cen_t, meta)
    logits = jax.block_until_ready(logits)

    ref = reference_forward(image, w_enc, class_centers, logit_scale)
    assert logits.shape == (B, K)
    assert jnp.allclose(logits, ref, rtol=5e-3, atol=5e-2), (
        f"mismatch vs reference: max abs err "
        f"{jnp.max(jnp.abs(logits - ref)):.4e}")

    print("KERNEL_OK")
</pallas_src>

<mosaic_0001>
module attributes {stable_mosaic.version = 11 : i64} {
  func.func @custom_clip_kernel(%arg0: i32, %arg1: memref<16x1024xbf16, #tpu.memory_space<vmem>>, %arg2: memref<1024x128xbf16, #tpu.memory_space<vmem>>, %arg3: memref<128x128xbf16, #tpu.memory_space<vmem>>, %arg4: memref<16x128xf32, #tpu.memory_space<vmem>>, %arg5: memref<16x128xf32, #tpu.memory_space<vmem>>) attributes {dimension_semantics = [#tpu.dimension_semantics<arbitrary>], iteration_bounds = array<i64: 1>, scalar_prefetch = 0 : i64, scratch_operands = 1 : i64, tpu.core_type = #tpu.core_type<tc>, window_params = [{pipeline_mode = #tpu.pipeline_mode<synchronous>, transform_indices = @transform_0, window_bounds = array<i64: 16, 1024>}, {transform_indices = @transform_1, window_bounds = array<i64: 1024, 128>}, {pipeline_mode = #tpu.pipeline_mode<synchronous>, transform_indices = @transform_2, window_bounds = array<i64: 128, 128>}, {pipeline_mode = #tpu.pipeline_mode<synchronous>, transform_indices = @transform_3, window_bounds = array<i64: 16, 128>}]} {
    %c0_i32 = arith.constant 0 : i32
    %0 = arith.cmpi eq, %arg0, %c0_i32 : i32
    %1 = arith.extui %0 : i1 to i32
    %c0_i32_0 = arith.constant 0 : i32
    %2 = arith.cmpi ne, %1, %c0_i32_0 : i32
    scf.if %2 {
      %cst_9 = arith.constant 0.000000e+00 : f32
      %15 = vector.broadcast %cst_9 : f32 to vector<16x128xf32>
      %c0_10 = arith.constant 0 : index
      %c0_11 = arith.constant 0 : index
      %16 = vector.load %arg5[%c0_10, %c0_11] : memref<16x128xf32, #tpu.memory_space<vmem>>, vector<16x128xf32>
      tpu.vector_store %arg5[%c0_10, %c0_11], %15 {strides = array<i32>} : memref<16x128xf32, #tpu.memory_space<vmem>>, vector<16x128xf32>,
    } else {
    }
    %c1024_i32 = arith.constant 1024 : i32
    %3 = arith.muli %arg0, %c1024_i32 : i32
    %4 = tpu.assume_multiple %3, 256 : i32
    %c0 = arith.constant 0 : index
    %5 = arith.index_cast %4 : i32 to index
    %6 = vector.load %arg1[%c0, %5] : memref<16x1024xbf16, #tpu.memory_space<vmem>>, vector<16x1024xbf16>
    %c0_1 = arith.constant 0 : index
    %c0_2 = arith.constant 0 : index
    %7 = vector.load %arg5[%c0_1, %c0_2] : memref<16x128xf32, #tpu.memory_space<vmem>>, vector<16x128xf32>
    %c0_3 = arith.constant 0 : index
    %c0_4 = arith.constant 0 : index
    %8 = vector.load %arg2[%c0_3, %c0_4] : memref<1024x128xbf16, #tpu.memory_space<vmem>>, vector<1024x128xbf16>
    %cst = arith.constant dense<0.000000e+00> : vector<16x128xf32>
    %9 = tpu.matmul %6, %8, %cst {dimension_numbers = #tpu.dot_dimension_numbers<[1], [0], [0], [1], [0, 0, 1, 1], [], []>} : vector<16x1024xbf16>, vector<1024x128xbf16>, vector<16x128xf32> -> vector<16x128xf32>
    %10 = arith.addf %7, %9 : vector<16x128xf32>
    %c0_5 = arith.constant 0 : index
    %c0_6 = arith.constant 0 : index
    %11 = vector.load %arg5[%c0_5, %c0_6] : memref<16x128xf32, #tpu.memory_space<vmem>>, vector<16x128xf32>
    tpu.vector_store %arg5[%c0_5, %c0_6], %10 {strides = array<i32>} : memref<16x128xf32, #tpu.memory_space<vmem>>, vector<16x128xf32>,
    %c0_i32_7 = arith.constant 0 : i32
    %12 = arith.cmpi eq, %arg0, %c0_i32_7 : i32
    %13 = arith.extui %12 : i1 to i32
    %c0_i32_8 = arith.constant 0 : i32
    %14 = arith.cmpi ne, %13, %c0_i32_8 : i32
    scf.if %14 {
      %c0_9 = arith.constant 0 : index
      %c0_10 = arith.constant 0 : index
      %15 = vector.load %arg5[%c0_9, %c0_10] : memref<16x128xf32, #tpu.memory_space<vmem>>, vector<16x128xf32>
      %16 = arith.mulf %15, %15 : vector<16x128xf32>
      %cst_11 = arith.constant dense<0.000000e+00> : vector<16xf32>
      %17 = vector.multi_reduction <add>, %16, %cst_11 [1] : vector<16x128xf32> to vector<16xf32>
      %18 = vector.shape_cast %17 : vector<16xf32> to vector<16x1xf32>
      %cst_12 = arith.constant 9.99999996E-13 : f32
      %19 = vector.broadcast %cst_12 : f32 to vector<16x1xf32>
      %20 = arith.addf %18, %19 : vector<16x1xf32>
      %21 = math.rsqrt %20 : vector<16x1xf32>
      %22 = vector.broadcast %21 : vector<16x1xf32> to vector<16x128xf32>
      %23 = arith.mulf %15, %22 : vector<16x128xf32>
      %24 = arith.truncf %23 : vector<16x128xf32> to vector<16x128xbf16>
      %c0_13 = arith.constant 0 : index
      %c0_14 = arith.constant 0 : index
      %25 = vector.load %arg3[%c0_13, %c0_14] : memref<128x128xbf16, #tpu.memory_space<vmem>>, vector<128x128xbf16>
      %cst_15 = arith.constant dense<0.000000e+00> : vector<16x128xf32>
      %26 = tpu.matmul %24, %25, %cst_15 {dimension_numbers = #tpu.dot_dimension_numbers<[1], [0], [0], [1], [0, 0, 1, 1], [], []>} : vector<16x128xbf16>, vector<128x128xbf16>, vector<16x128xf32> -> vector<16x128xf32>
      %c0_16 = arith.constant 0 : index
      %c0_17 = arith.constant 0 : index
      %27 = vector.load %arg4[%c0_16, %c0_17] : memref<16x128xf32, #tpu.memory_space<vmem>>, vector<16x128xf32>
      tpu.vector_store %arg4[%c0_16, %c0_17], %26 {strides = array<i32>} : memref<16x128xf32, #tpu.memory_space<vmem>>, vector<16x128xf32>,
    } else {
    }
    return
  }
  func.func @transform_0(%arg0: i32) -> (i32, i32) {
    %c0_i32 = arith.constant 0 : i32
    %c0_i32_0 = arith.constant 0 : i32
    %c0_i32_1 = arith.constant 0 : i32
    return %c0_i32, %c0_i32_0 : i32, i32
  }
  func.func @transform_1(%arg0: i32) -> (i32, i32) {
    %c0_i32 = arith.constant 0 : i32
    %c0_i32_0 = arith.constant 0 : i32
    return %arg0, %c0_i32 : i32, i32
  }
  func.func @transform_2(%arg0: i32) -> (i32, i32) {
    %c0_i32 = arith.constant 0 : i32
    %c0_i32_0 = arith.constant 0 : i32
    %c0_i32_1 = arith.constant 0 : i32
    return %c0_i32, %c0_i32_0 : i32, i32
  }
  func.func @transform_3(%arg0: i32) -> (i32, i32) {
    %c0_i32 = arith.constant 0 : i32
    %c0_i32_0 = arith.constant 0 : i32
    %c0_i32_1 = arith.constant 0 : i32
    return %c0_i32, %c0_i32_0 : i32, i32
  }
}

</mosaic_0001>

<llo_original>
// kernel: tpu_custom_call.1
$region0: #{tpu_custom_call.1}
  #allocation0 [shape = 'u32[]', space=smem, size = 0x4, offset = 0x4, fixed_abs, tag = 'smem constant byte address 0x4 - core index']
  #allocation1 [shape = 'u32[144,128]{1,0:T(1,128)}', space=vmem, size = 0x12000, scoped, tag = 'internal scratch']
  #allocation2 [shape = 'f32[16,128]{1,0:T(8,128)}', space=vmem, size = 0x2000, scoped, tag = 'scratch operand']
  %s0 = inlined_call_operand.hbm [shape: bf16[16,1024], index: 0, kind: input, shape index: {}]
  %s1 = inlined_call_operand.hbm [shape: bf16[1024,128], index: 1, kind: input, shape index: {}]
  %s2 = inlined_call_operand.hbm [shape: bf16[128,128], index: 2, kind: input, shape index: {}]
  %s3 = inlined_call_operand.hbm [shape: f32[16,128], index: 3, kind: output, shape index: {}]
  %s4 = sld [smem:[#allocation0]]
  $region42: #{tpu_custom_call.1} parent=0
    _
  %s6 = ssub.s32 1, %s4
  %s7 = scalar_select 0, %s6, %s4
  $region1: #{tpu_custom_call.1} parent=0
    #allocation3 [shape = 'u8[32768]{0}', space=vmem, size = 0x8000, scoped, tag = 'input window, operand 0, single buffered']
    #allocation4 [shape = 's32[1]{0}', space=sflag, size = 0x4, scoped, tag = 'scoped memory for tpu_custom_call.1']
    #allocation5 [shape = 's32[1]{0}', space=sflag, size = 0x4, scoped, tag = 'scoped memory for tpu_custom_call.1']
    #allocation6 [shape = 'u8[262144]{0}', space=vmem, size = 0x40000, scoped, tag = 'input window, operand 1, single buffered']
    #allocation7 [shape = 's32[1]{0}', space=sflag, size = 0x4, scoped, tag = 'scoped memory for tpu_custom_call.1']
    #allocation8 [shape = 'u8[32768]{0}', space=vmem, size = 0x8000, scoped, tag = 'input window, operand 2, single buffered']
    #allocation9 [shape = 'u8[8192]{0}', space=vmem, size = 0x2000, scoped, tag = 'output window, operand 0, single buffered']
    %8 = vsyncpa [#allocation4], 0
    %9 = vsyncpa [#allocation7], 0
    %10 = vsyncpa [#allocation5], 0
    // Predicated region
    $region2: #{tpu_custom_call.1} parent=1 // pred_check
      _
    $region3: #{tpu_custom_call.1} parent=1 // pred_check_branch
      %12 = sbr.rel (0) target = $region5
    $region4: #{tpu_custom_call.1} parent=1 // pred_region
      %s14 = ssub.s32 1024, 1024
      %15 = vsyncadd [#allocation4], %s14
      %s16 = sshll.u32 [#allocation3], 4
      %s17 = int_to_ptr.vmem [resolvable:$true] %s16
      %22 = dma.hbm_to_vmem [thread:$0]  %s0, 1024, %s17, [#allocation4], 512, 512, 32
    $region5: #{tpu_custom_call.1} parent=1 // pred_fallthru
      _
    // Predicated region
    $region6: #{tpu_custom_call.1} parent=1 // pred_check
      _
    $region7: #{tpu_custom_call.1} parent=1 // pred_check_branch
      %24 = sbr.rel (0) target = $region9
    $region8: #{tpu_custom_call.1} parent=1 // pred_region
      %s26 = ssub.s32 8192, 8192
      %27 = vsyncadd [#allocation7], %s26
      %s28 = sshll.u32 [#allocation6], 4
      %s29 = int_to_ptr.vmem [resolvable:$true] %s28
      %34 = dma.hbm_to_vmem [thread:$0]  %s1, 8192, %s29, [#allocation7], 64, 64, 4
    $region9: #{tpu_custom_call.1} parent=1 // pred_fallthru
      _
    // Predicated region
    $region10: #{tpu_custom_call.1} parent=1 // pred_check
      _
    $region11: #{tpu_custom_call.1} parent=1 // pred_check_branch
      %36 = sbr.rel (0) target = $region13
    $region12: #{tpu_custom_call.1} parent=1 // pred_region
      %s38 = ssub.s32 1024, 1024
      %39 = vsyncadd [#allocation7], %s38
      %s40 = sshll.u32 [#allocation8], 4
      %s41 = int_to_ptr.vmem [resolvable:$true] %s40
      %46 = dma.hbm_to_vmem [thread:$0]  %s2, 1024, %s41, [#allocation7], 64, 64, 4
    $region13: #{tpu_custom_call.1} parent=1 // pred_fallthru
      _
    // Predicated region
    $region14: #{tpu_custom_call.1} parent=1 // pred_check
      _
    $region15: #{tpu_custom_call.1} parent=1 // pred_check_branch
      %48 = sbr.rel (0) target = $region17
    $region16: #{tpu_custom_call.1} parent=1 // pred_region
      %49 = dma.done [#allocation4], 1024
    $region17: #{tpu_custom_call.1} parent=1 // pred_fallthru
      _
    // Predicated region
    $region18: #{tpu_custom_call.1} parent=1 // pred_check
      _
    $region19: #{tpu_custom_call.1} parent=1 // pred_check_branch
      %51 = sbr.rel (0) target = $region21
    $region20: #{tpu_custom_call.1} parent=1 // pred_region
      %52 = dma.done [#allocation7], 8192
    $region21: #{tpu_custom_call.1} parent=1 // pred_fallthru
      _
    // Predicated region
    $region22: #{tpu_custom_call.1} parent=1 // pred_check
      _
    $region23: #{tpu_custom_call.1} parent=1 // pred_check_branch
      %54 = sbr.rel (0) target = $region25
    $region24: #{tpu_custom_call.1} parent=1 // pred_region
      %55 = dma.done [#allocation7], 1024
    $region25: #{tpu_custom_call.1} parent=1 // pred_fallthru
      _
    %p57 = scmp.eq.s32.totalorder 0, 0
    // Predicated region
    $region26: #{tpu_custom_call.1} parent=1 // pred_check
      %p58 = pneg %p57
    $region27: #{tpu_custom_call.1} parent=1 // pred_check_branch
      %60 = sbr.rel (%p58) target = $region29
    $region28: #{tpu_custom_call.1} parent=1 // pred_region
      %61 = vst [vmem:[#allocation2] sm:$0xff] 0.0
      %62 = vst [vmem:[#allocation2 + $0x8] sm:$0xff] 0.0
    $region29: #{tpu_custom_call.1} parent=1 // pred_fallthru
      _
    %s63 = smul.u32 0, 1024
    %s64 = sshra.s32 %s63, 7
    %s65 = sand.u32 %s63, 127
    %s66 = smul.addr %s64, 4
    %s67 = scalar_lea.vmem [#allocation3], %s66
    %v68 = vld [vmem:[%s67] sm:$0xff]
    %v69 = vld [vmem:[%s67 + $0x8] sm:$0xff]
    %v70 = vld [vmem:[%s67 + $0x10] sm:$0xff]
    %v71 = vld [vmem:[%s67 + $0x18] sm:$0xff]
    %v72 = vld [vmem:[%s67 + $0x20] sm:$0xff]
    %v73 = vld [vmem:[%s67 + $0x28] sm:$0xff]
    %v74 = vld [vmem:[%s67 + $0x30] sm:$0xff]
    %v75 = vld [vmem:[%s67 + $0x38] sm:$0xff]
    %v76 = vld [vmem:[#allocation2] sm:$0xff]
    %v77 = vld [vmem:[#allocation2 + $0x8] sm:$0xff]
    %v78 = vld [vmem:[#allocation6] sm:$0xf]
    %v79 = vld [vmem:[#allocation6 + $0x4] sm:$0xf]
    %v80 = vld [vmem:[#allocation6 + $0x8] sm:$0xf]
    %v81 = vld [vmem:[#allocation6 + $0xc] sm:$0xf]
    %v82 = vld [vmem:[#allocation6 + $0x10] sm:$0xf]
    %v83 = vld [vmem:[#allocation6 + $0x14] sm:$0xf]
    %v84 = vld [vmem:[#allocation6 + $0x18] sm:$0xf]
    %v85 = vld [vmem:[#allocation6 + $0x1c] sm:$0xf]
    %v86 = vld [vmem:[#allocation6 + $0x20] sm:$0xf]
    %v87 = vld [vmem:[#allocation6 + $0x24] sm:$0xf]
    %v88 = vld [vmem:[#allocation6 + $0x28] sm:$0xf]
    %v89 = vld [vmem:[#allocation6 + $0x2c] sm:$0xf]
    %v90 = vld [vmem:[#allocation6 + $0x30] sm:$0xf]
    %v91 = vld [vmem:[#allocation6 + $0x34] sm:$0xf]
    %v92 = vld [vmem:[#allocation6 + $0x38] sm:$0xf]
    %v93 = vld [vmem:[#allocation6 + $0x3c] sm:$0xf]
    %v94 = vld [vmem:[#allocation6 + $0x40] sm:$0xf]
    %v95 = vld [vmem:[#allocation6 + $0x44] sm:$0xf]
    %v96 = vld [vmem:[#allocation6 + $0x48] sm:$0xf]
    %v97 = vld [vmem:[#allocation6 + $0x4c] sm:$0xf]
    %v98 = vld [vmem:[#allocation6 + $0x50] sm:$0xf]
    %v99 = vld [vmem:[#allocation6 + $0x54] sm:$0xf]
    %v100 = vld [vmem:[#allocation6 + $0x58] sm:$0xf]
    %v101 = vld [vmem:[#allocation6 + $0x5c] sm:$0xf]
    %v102 = vld [vmem:[#allocation6 + $0x60] sm:$0xf]
    %v103 = vld [vmem:[#allocation6 + $0x64] sm:$0xf]
    %v104 = vld [vmem:[#allocation6 + $0x68] sm:$0xf]
    %v105 = vld [vmem:[#allocation6 + $0x6c] sm:$0xf]
    %v106 = vld [vmem:[#allocation6 + $0x70] sm:$0xf]
    %v107 = vld [vmem:[#allocation6 + $0x74] sm:$0xf]
    %v108 = vld [vmem:[#allocation6 + $0x78] sm:$0xf]
    %v109 = vld [vmem:[#allocation6 + $0x7c] sm:$0xf]
    %v110 = vld [vmem:[#allocation6 + $0x80] sm:$0xf]
    %v111 = vld [vmem:[#allocation6 + $0x84] sm:$0xf]
    %v112 = vld [vmem:[#allocation6 + $0x88] sm:$0xf]
    %v113 = vld [vmem:[#allocation6 + $0x8c] sm:$0xf]
    %v114 = vld [vmem:[#allocation6 + $0x90] sm:$0xf]
    %v115 = vld [vmem:[#allocation6 + $0x94] sm:$0xf]
    %v116 = vld [vmem:[#allocation6 + $0x98] sm:$0xf]
    %v117 = vld [vmem:[#allocation6 + $0x9c] sm:$0xf]
    %v118 = vld [vmem:[#allocation6 + $0xa0] sm:$0xf]
    %v119 = vld [vmem:[#allocation6 + $0xa4] sm:$0xf]
    %v120 = vld [vmem:[#allocation6 + $0xa8] sm:$0xf]
    %v121 = vld [vmem:[#allocation6 + $0xac] sm:$0xf]
    %v122 = vld [vmem:[#allocation6 + $0xb0] sm:$0xf]
    %v123 = vld [vmem:[#allocation6 + $0xb4] sm:$0xf]
    %v124 = vld [vmem:[#allocation6 + $0xb8] sm:$0xf]
    %v125 = vld [vmem:[#allocation6 + $0xbc] sm:$0xf]
    %v126 = vld [vmem:[#allocation6 + $0xc0] sm:$0xf]
    %v127 = vld [vmem:[#allocation6 + $0xc4] sm:$0xf]
    %v128 = vld [vmem:[#allocation6 + $0xc8] sm:$0xf]
    %v129 = vld [vmem:[#allocation6 + $0xcc] sm:$0xf]
    %v130 = vld [vmem:[#allocation6 + $0xd0] sm:$0xf]
    %v131 = vld [vmem:[#allocation6 + $0xd4] sm:$0xf]
    %v132 = vld [vmem:[#allocation6 + $0xd8] sm:$0xf]
    %v133 = vld [vmem:[#allocation6 + $0xdc] sm:$0xf]
    %v134 = vld [vmem:[#allocation6 + $0xe0] sm:$0xf]
    %v135 = vld [vmem:[#allocation6 + $0xe4] sm:$0xf]
    %v136 = vld [vmem:[#allocation6 + $0xe8] sm:$0xf]
    %v137 = vld [vmem:[#allocation6 + $0xec] sm:$0xf]
    %v138 = vld [vmem:[#allocation6 + $0xf0] sm:$0xf]
    %v139 = vld [vmem:[#allocation6 + $0xf4] sm:$0xf]
    %v140 = vld [vmem:[#allocation6 + $0xf8] sm:$0xf]
    %v141 = vld [vmem:[#allocation6 + $0xfc] sm:$0xf]
    %v142 = vld [vmem:[#allocation6 + $0x100] sm:$0xf]
    %v143 = vld [vmem:[#allocation6 + $0x104] sm:$0xf]
    %v144 = vld [vmem:[#allocation6 + $0x108] sm:$0xf]
    %v145 = vld [vmem:[#allocation6 + $0x10c] sm:$0xf]
    %v146 = vld [vmem:[#allocation6 + $0x110] sm:$0xf]
    %v147 = vld [vmem:[#allocation6 + $0x114] sm:$0xf]
    %v148 = vld [vmem:[#allocation6 + $0x118] sm:$0xf]
    %v149 = vld [vmem:[#allocation6 + $0x11c] sm:$0xf]
    %v150 = vld [vmem:[#allocation6 + $0x120] sm:$0xf]
    %v151 = vld [vmem:[#allocation6 + $0x124] sm:$0xf]
    %v152 = vld [vmem:[#allocation6 + $0x128] sm:$0xf]
    %v153 = vld [vmem:[#allocation6 + $0x12c] sm:$0xf]
    %v154 = vld [vmem:[#allocation6 + $0x130] sm:$0xf]
    %v155 = vld [vmem:[#allocation6 + $0x134] sm:$0xf]
    %v156 = vld [vmem:[#allocation6 + $0x138] sm:$0xf]
    %v157 = vld [vmem:[#allocation6 + $0x13c] sm:$0xf]
    %v158 = vld [vmem:[#allocation6 + $0x140] sm:$0xf]
    %v159 = vld [vmem:[#allocation6 + $0x144] sm:$0xf]
    %v160 = vld [vmem:[#allocation6 + $0x148] sm:$0xf]
    %v161 = vld [vmem:[#allocation6 + $0x14c] sm:$0xf]
    %v162 = vld [vmem:[#allocation6 + $0x150] sm:$0xf]
    %v163 = vld [vmem:[#allocation6 + $0x154] sm:$0xf]
    %v164 = vld [vmem:[#allocation6 + $0x158] sm:$0xf]
    %v165 = vld [vmem:[#allocation6 + $0x15c] sm:$0xf]
    %v166 = vld [vmem:[#allocation6 + $0x160] sm:$0xf]
    %v167 = vld [vmem:[#allocation6 + $0x164] sm:$0xf]
    %v168 = vld [vmem:[#allocation6 + $0x168] sm:$0xf]
    %v169 = vld [vmem:[#allocation6 + $0x16c] sm:$0xf]
    %v170 = vld [vmem:[#allocation6 + $0x170] sm:$0xf]
    %v171 = vld [vmem:[#allocation6 + $0x174] sm:$0xf]
    %v172 = vld [vmem:[#allocation6 + $0x178] sm:$0xf]
    %v173 = vld [vmem:[#allocation6 + $0x17c] sm:$0xf]
    %v174 = vld [vmem:[#allocation6 + $0x180] sm:$0xf]
    %v175 = vld [vmem:[#allocation6 + $0x184] sm:$0xf]
    %v176 = vld [vmem:[#allocation6 + $0x188] sm:$0xf]
    %v177 = vld [vmem:[#allocation6 + $0x18c] sm:$0xf]
    %v178 = vld [vmem:[#allocation6 + $0x190] sm:$0xf]
    %v179 = vld [vmem:[#allocation6 + $0x194] sm:$0xf]
    %v180 = vld [vmem:[#allocation6 + $0x198] sm:$0xf]
    %v181 = vld [vmem:[#allocation6 + $0x19c] sm:$0xf]
    %v182 = vld [vmem:[#allocation6 + $0x1a0] sm:$0xf]
    %v183 = vld [vmem:[#allocation6 + $0x1a4] sm:$0xf]
    %v184 = vld [vmem:[#allocation6 + $0x1a8] sm:$0xf]
    %v185 = vld [vmem:[#allocation6 + $0x1ac] sm:$0xf]
    %v186 = vld [vmem:[#allocation6 + $0x1b0] sm:$0xf]
    %v187 = vld [vmem:[#allocation6 + $0x1b4] sm:$0xf]
    %v188 = vld [vmem:[#allocation6 + $0x1b8] sm:$0xf]
    %v189 = vld [vmem:[#allocation6 + $0x1bc] sm:$0xf]
    %v190 = vld [vmem:[#allocation6 + $0x1c0] sm:$0xf]
    %v191 = vld [vmem:[#allocation6 + $0x1c4] sm:$0xf]
    %v192 = vld [vmem:[#allocation6 + $0x1c8] sm:$0xf]
    %v193 = vld [vmem:[#allocation6 + $0x1cc] sm:$0xf]
    %v194 = vld [vmem:[#allocation6 + $0x1d0] sm:$0xf]
    %v195 = vld [vmem:[#allocation6 + $0x1d4] sm:$0xf]
    %v196 = vld [vmem:[#allocation6 + $0x1d8] sm:$0xf]
    %v197 = vld [vmem:[#allocation6 + $0x1dc] sm:$0xf]
    %v198 = vld [vmem:[#allocation6 + $0x1e0] sm:$0xf]
    %v199 = vld [vmem:[#allocation6 + $0x1e4] sm:$0xf]
    %v200 = vld [vmem:[#allocation6 + $0x1e8] sm:$0xf]
    %v201 = vld [vmem:[#allocation6 + $0x1ec] sm:$0xf]
    %v202 = vld [vmem:[#allocation6 + $0x1f0] sm:$0xf]
    %v203 = vld [vmem:[#allocation6 + $0x1f4] sm:$0xf]
    %v204 = vld [vmem:[#allocation6 + $0x1f8] sm:$0xf]
    %v205 = vld [vmem:[#allocation6 + $0x1fc] sm:$0xf]
    %v214 = vunpack.c.l.b16 %v68
    %v215 = vunpack.c.h.b16 %v68
    %v216 = vunpack.c.l.b16 %v69
    %v217 = vunpack.c.h.b16 %v69
    %v218 = vunpack.c.l.b16 %v70
    %v219 = vunpack.c.h.b16 %v70
    %v220 = vunpack.c.l.b16 %v71
    %v221 = vunpack.c.h.b16 %v71
    %v222 = vunpack.c.l.b16 %v72
    %v223 = vunpack.c.h.b16 %v72
    %v224 = vunpack.c.l.b16 %v73
    %v225 = vunpack.c.h.b16 %v73
    %v226 = vunpack.c.l.b16 %v74
    %v227 = vunpack.c.h.b16 %v74
    %v228 = vunpack.c.l.b16 %v75
    %v229 = vunpack.c.h.b16 %v75
    %v230 = vpack.c.b16 %v222, %v214
    %v231 = vpack.c.b16 %v223, %v215
    %v232 = vpack.c.b16 %v224, %v216
    %v233 = vpack.c.b16 %v225, %v217
    %v234 = vpack.c.b16 %v226, %v218
    %v235 = vpack.c.b16 %v227, %v219
    %v236 = vpack.c.b16 %v228, %v220
    %v237 = vpack.c.b16 %v229, %v221
    %v374 = vunpack.c.l.b16 %v78
    %v375 = vunpack.c.l.b16 %v79
    %v376 = vunpack.c.l.b16 %v80
    %v377 = vunpack.c.l.b16 %v81
    %v378 = vunpack.c.l.b16 %v82
    %v379 = vunpack.c.l.b16 %v83
    %v380 = vunpack.c.l.b16 %v84
    %v381 = vunpack.c.l.b16 %v85
    %v382 = vunpack.c.l.b16 %v86
    %v383 = vunpack.c.l.b16 %v87
    %v384 = vunpack.c.l.b16 %v88
    %v385 = vunpack.c.l.b16 %v89
    %v386 = vunpack.c.l.b16 %v90
    %v387 = vunpack.c.l.b16 %v91
    %v388 = vunpack.c.l.b16 %v92
    %v389 = vunpack.c.l.b16 %v93
    %v390 = vunpack.c.l.b16 %v94
    %v391 = vunpack.c.l.b16 %v95
    %v392 = vunpack.c.l.b16 %v96
    %v393 = vunpack.c.l.b16 %v97
    %v394 = vunpack.c.l.b16 %v98
    %v395 = vunpack.c.l.b16 %v99
    %v396 = vunpack.c.l.b16 %v100
    %v397 = vunpack.c.l.b16 %v101
    %v398 = vunpack.c.l.b16 %v102
    %v399 = vunpack.c.l.b16 %v103
    %v400 = vunpack.c.l.b16 %v104
    %v401 = vunpack.c.l.b16 %v105
    %v402 = vunpack.c.l.b16 %v106
    %v403 = vunpack.c.l.b16 %v107
    %v404 = vunpack.c.l.b16 %v108
    %v405 = vunpack.c.l.b16 %v109
    %v406 = vunpack.c.l.b16 %v110
    %v407 = vunpack.c.l.b16 %v111
    %v408 = vunpack.c.l.b16 %v112
    %v409 = vunpack.c.l.b16 %v113
    %v410 = vunpack.c.l.b16 %v114
    %v411 = vunpack.c.l.b16 %v115
    %v412 = vunpack.c.l.b16 %v116
    %v413 = vunpack.c.l.b16 %v117
    %v414 = vunpack.c.l.b16 %v118
    %v415 = vunpack.c.l.b16 %v119
    %v416 = vunpack.c.l.b16 %v120
    %v417 = vunpack.c.l.b16 %v121
    %v418 = vunpack.c.l.b16 %v122
    %v419 = vunpack.c.l.b16 %v123
    %v420 = vunpack.c.l.b16 %v124
    %v421 = vunpack.c.l.b16 %v125
    %v422 = vunpack.c.l.b16 %v126
    %v423 = vunpack.c.l.b16 %v127
    %v424 = vunpack.c.l.b16 %v128
    %v425 = vunpack.c.l.b16 %v129
    %v426 = vunpack.c.l.b16 %v130
    %v427 = vunpack.c.l.b16 %v131
    %v428 = vunpack.c.l.b16 %v132
    %v429 = vunpack.c.l.b16 %v133
    %v430 = vunpack.c.l.b16 %v134
    %v431 = vunpack.c.l.b16 %v135
    %v432 = vunpack.c.l.b16 %v136
    %v433 = vunpack.c.l.b16 %v137
    %v434 = vunpack.c.l.b16 %v138
    %v435 = vunpack.c.l.b16 %v139
    %v436 = vunpack.c.l.b16 %v140
    %v437 = vunpack.c.l.b16 %v141
    %v438 = vunpack.c.l.b16 %v142
    %v439 = vunpack.c.l.b16 %v143
    %v440 = vunpack.c.l.b16 %v144
    %v441 = vunpack.c.l.b16 %v145
    %v442 = vunpack.c.l.b16 %v146
    %v443 = vunpack.c.l.b16 %v147
    %v444 = vunpack.c.l.b16 %v148
    %v445 = vunpack.c.l.b16 %v149
    %v446 = vunpack.c.l.b16 %v150
    %v447 = vunpack.c.l.b16 %v151
    %v448 = vunpack.c.l.b16 %v152
    %v449 = vunpack.c.l.b16 %v153
    %v450 = vunpack.c.l.b16 %v154
    %v451 = vunpack.c.l.b16 %v155
    %v452 = vunpack.c.l.b16 %v156
    %v453 = vunpack.c.l.b16 %v157
    %v454 = vunpack.c.l.b16 %v158
    %v455 = vunpack.c.l.b16 %v159
    %v456 = vunpack.c.l.b16 %v160
    %v457 = vunpack.c.l.b16 %v161
    %v458 = vunpack.c.l.b16 %v162
    %v459 = vunpack.c.l.b16 %v163
    %v460 = vunpack.c.l.b16 %v164
    %v461 = vunpack.c.l.b16 %v165
    %v462 = vunpack.c.l.b16 %v166
    %v463 = vunpack.c.l.b16 %v167
    %v464 = vunpack.c.l.b16 %v168
    %v465 = vunpack.c.l.b16 %v169
    %v466 = vunpack.c.l.b16 %v170
    %v467 = vunpack.c.l.b16 %v171
    %v468 = vunpack.c.l.b16 %v172
    %v469 = vunpack.c.l.b16 %v173
    %v470 = vunpack.c.l.b16 %v174
    %v471 = vunpack.c.l.b16 %v175
    %v472 = vunpack.c.l.b16 %v176
    %v473 = vunpack.c.l.b16 %v177
    %v474 = vunpack.c.l.b16 %v178
    %v475 = vunpack.c.l.b16 %v179
    %v476 = vunpack.c.l.b16 %v180
    %v477 = vunpack.c.l.b16 %v181
    %v478 = vunpack.c.l.b16 %v182
    %v479 = vunpack.c.l.b16 %v183
    %v480 = vunpack.c.l.b16 %v184
    %v481 = vunpack.c.l.b16 %v185
    %v482 = vunpack.c.l.b16 %v186
    %v483 = vunpack.c.l.b16 %v187
    %v484 = vunpack.c.l.b16 %v188
    %v485 = vunpack.c.l.b16 %v189
    %v486 = vunpack.c.l.b16 %v190
    %v487 = vunpack.c.l.b16 %v191
    %v488 = vunpack.c.l.b16 %v192
    %v489 = vunpack.c.l.b16 %v193
    %v490 = vunpack.c.l.b16 %v194
    %v491 = vunpack.c.l.b16 %v195
    %v492 = vunpack.c.l.b16 %v196
    %v493 = vunpack.c.l.b16 %v197
    %v494 = vunpack.c.l.b16 %v198
    %v495 = vunpack.c.l.b16 %v199
    %v496 = vunpack.c.l.b16 %v200
    %v497 = vunpack.c.l.b16 %v201
    %v498 = vunpack.c.l.b16 %v202
    %v499 = vunpack.c.l.b16 %v203
    %v500 = vunpack.c.l.b16 %v204
    %v501 = vunpack.c.l.b16 %v205
    %v502 = vpack.c.b16 %v375, %v374
    %v503 = vpack.c.b16 %v377, %v376
    %v504 = vpack.c.b16 %v379, %v378
    %v505 = vpack.c.b16 %v381, %v380
    %v506 = vpack.c.b16 %v383, %v382
    %v507 = vpack.c.b16 %v385, %v384
    %v508 = vpack.c.b16 %v387, %v386
    %v509 = vpack.c.b16 %v389, %v388
    %v510 = vpack.c.b16 %v391, %v390
    %v511 = vpack.c.b16 %v393, %v392
    %v512 = vpack.c.b16 %v395, %v394
    %v513 = vpack.c.b16 %v397, %v396
    %v514 = vpack.c.b16 %v399, %v398
    %v515 = vpack.c.b16 %v401, %v400
    %v516 = vpack.c.b16 %v403, %v402
    %v517 = vpack.c.b16 %v405, %v404
    %v518 = vpack.c.b16 %v407, %v406
    %v519 = vpack.c.b16 %v409, %v408
    %v520 = vpack.c.b16 %v411, %v410
    %v521 = vpack.c.b16 %v413, %v412
    %v522 = vpack.c.b16 %v415, %v414
    %v523 = vpack.c.b16 %v417, %v416
    %v524 = vpack.c.b16 %v419, %v418
    %v525 = vpack.c.b16 %v421, %v420
    %v526 = vpack.c.b16 %v423, %v422
    %v527 = vpack.c.b16 %v425, %v424
    %v528 = vpack.c.b16 %v427, %v426
    %v529 = vpack.c.b16 %v429, %v428
    %v530 = vpack.c.b16 %v431, %v430
    %v531 = vpack.c.b16 %v433, %v432
    %v532 = vpack.c.b16 %v435, %v434
    %v533 = vpack.c.b16 %v437, %v436
    %v534 = vpack.c.b16 %v439, %v438
    %v535 = vpack.c.b16 %v441, %v440
    %v536 = vpack.c.b16 %v443, %v442
    %v537 = vpack.c.b16 %v445, %v444
    %v538 = vpack.c.b16 %v447, %v446
    %v539 = vpack.c.b16 %v449, %v448
    %v540 = vpack.c.b16 %v451, %v450
    %v541 = vpack.c.b16 %v453, %v452
    %v542 = vpack.c.b16 %v455, %v454
    %v543 = vpack.c.b16 %v457, %v456
    %v544 = vpack.c.b16 %v459, %v458
    %v545 = vpack.c.b16 %v461, %v460
    %v546 = vpack.c.b16 %v463, %v462
    %v547 = vpack.c.b16 %v465, %v464
    %v548 = vpack.c.b16 %v467, %v466
    %v549 = vpack.c.b16 %v469, %v468
    %v550 = vpack.c.b16 %v471, %v470
    %v551 = vpack.c.b16 %v473, %v472
    %v552 = vpack.c.b16 %v475, %v474
    %v553 = vpack.c.b16 %v477, %v476
    %v554 = vpack.c.b16 %v479, %v478
    %v555 = vpack.c.b16 %v481, %v480
    %v556 = vpack.c.b16 %v483, %v482
    %v557 = vpack.c.b16 %v485, %v484
    %v558 = vpack.c.b16 %v487, %v486
    %v559 = vpack.c.b16 %v489, %v488
    %v560 = vpack.c.b16 %v491, %v490
    %v561 = vpack.c.b16 %v493, %v492
    %v562 = vpack.c.b16 %v495, %v494
    %v563 = vpack.c.b16 %v497, %v496
    %v564 = vpack.c.b16 %v499, %v498
    %v565 = vpack.c.b16 %v501, %v500
    %630 = vmatprep.subr.bf16.mxu0 0
    %631 = vmatpush1.bf16.msra.mxu0 %v502
    %632 = vmatprep.subr.bf16.mxu0 0
    %633 = vmatpush1.bf16.msra.mxu0 %v503
    %634 = vmatprep.subr.bf16.mxu0 0
    %635 = vmatpush1.bf16.msra.mxu0 %v504
    %636 = vmatprep.subr.bf16.mxu0 0
    %637 = vmatpush1.bf16.msra.mxu0 %v505
    %638 = vmatprep.subr.bf16.mxu0 0
    %639 = vmatpush1.bf16.msra.mxu0 %v506
    %640 = vmatprep.subr.bf16.mxu0 0
    %641 = vmatpush1.bf16.msra.mxu0 %v507
    %642 = vmatprep.subr.bf16.mxu0 0
    %643 = vmatpush1.bf16.msra.mxu0 %v508
    %644 = vmatprep.subr.bf16.mxu0 0
    %645 = vmatpush1.bf16.msra.mxu0 %v509
    %646 = vmatprep.subr.bf16.mxu0 0
    %647 = vmatpush1.bf16.msra.mxu0 %v510
    %648 = vmatprep.subr.bf16.mxu0 0
    %649 = vmatpush1.bf16.msra.mxu0 %v511
    %650 = vmatprep.subr.bf16.mxu0 0
    %651 = vmatpush1.bf16.msra.mxu0 %v512
    %652 = vmatprep.subr.bf16.mxu0 0
    %653 = vmatpush1.bf16.msra.mxu0 %v513
    %654 = vmatprep.subr.bf16.mxu0 0
    %655 = vmatpush1.bf16.msra.mxu0 %v514
    %656 = vmatprep.subr.bf16.mxu0 0
    %657 = vmatpush1.bf16.msra.mxu0 %v515
    %658 = vmatprep.subr.bf16.mxu0 0
    %659 = vmatpush1.bf16.msra.mxu0 %v516
    %660 = vmatprep.subr.bf16.mxu0 0
    %661 = vmatpush1.bf16.msra.mxu0 %v517
    %662 = vmatprep.mubr.bf16.mxu0 %v231
    %663 = vmatmul.mubr.bf16.gmra.mrb[0].mxu0 %v230
    %v664 = vpop.f32.mrb[0].mxu0
    %v665 = vadd.f32 0.0, %v664
    %v666 = vpop.f32.mrb[0].mxu0
    %v667 = vpop.f32.mrb[0].mxu0
    %v668 = vadd.f32 0.0, %v667
    %v669 = vpop.f32.mrb[0].mxu0
    %670 = vdwg.mxu0
    %671 = vmatprep.subr.bf16.mxu0 0
    %672 = vmatpush1.bf16.msra.mxu0 %v518
    %673 = vmatprep.subr.bf16.mxu0 0
    %674 = vmatpush1.bf16.msra.mxu0 %v519
    %675 = vmatprep.subr.bf16.mxu0 0
    %676 = vmatpush1.bf16.msra.mxu0 %v520
    %677 = vmatprep.subr.bf16.mxu0 0
    %678 = vmatpush1.bf16.msra.mxu0 %v521
    %679 = vmatprep.subr.bf16.mxu0 0
    %680 = vmatpush1.bf16.msra.mxu0 %v522
    %681 = vmatprep.subr.bf16.mxu0 0
    %682 = vmatpush1.bf16.msra.mxu0 %v523
    %683 = vmatprep.subr.bf16.mxu0 0
    %684 = vmatpush1.bf16.msra.mxu0 %v524
    %685 = vmatprep.subr.bf16.mxu0 0
    %686 = vmatpush1.bf16.msra.mxu0 %v525
    %687 = vmatprep.subr.bf16.mxu0 0
    %688 = vmatpush1.bf16.msra.mxu0 %v526
    %689 = vmatprep.subr.bf16.mxu0 0
    %690 = vmatpush1.bf16.msra.mxu0 %v527
    %691 = vmatprep.subr.bf16.mxu0 0
    %692 = vmatpush1.bf16.msra.mxu0 %v528
    %693 = vmatprep.subr.bf16.mxu0 0
    %694 = vmatpush1.bf16.msra.mxu0 %v529
    %695 = vmatprep.subr.bf16.mxu0 0
    %696 = vmatpush1.bf16.msra.mxu0 %v530
    %697 = vmatprep.subr.bf16.mxu0 0
    %698 = vmatpush1.bf16.msra.mxu0 %v531
    %699 = vmatprep.subr.bf16.mxu0 0
    %700 = vmatpush1.bf16.msra.mxu0 %v532
    %701 = vmatprep.subr.bf16.mxu0 0
    %702 = vmatpush1.bf16.msra.mxu0 %v533
    %703 = vmatprep.mubr.bf16.mxu0 %v233
    %704 = vmatmul.mubr.bf16.gmra.mrb[0].mxu0 %v232
    %v705 = vpop.f32.mrb[0].mxu0
    %v706 = vadd.f32 %v665, %v705
    %v707 = vpop.f32.mrb[0].mxu0
    %v708 = vpop.f32.mrb[0].mxu0
    %v709 = vadd.f32 %v668, %v708
    %v710 = vpop.f32.mrb[0].mxu0
    %711 = vdwg.mxu0
    %712 = vmatprep.subr.bf16.mxu0 0
    %713 = vmatpush1.bf16.msra.mxu0 %v534
    %714 = vmatprep.subr.bf16.mxu0 0
    %715 = vmatpush1.bf16.msra.mxu0 %v535
    %716 = vmatprep.subr.bf16.mxu0 0
    %717 = vmatpush1.bf16.msra.mxu0 %v536
    %718 = vmatprep.subr.bf16.mxu0 0
    %719 = vmatpush1.bf16.msra.mxu0 %v537
    %720 = vmatprep.subr.bf16.mxu0 0
    %721 = vmatpush1.bf16.msra.mxu0 %v538
    %722 = vmatprep.subr.bf16.mxu0 0
    %723 = vmatpush1.bf16.msra.mxu0 %v539
    %724 = vmatprep.subr.bf16.mxu0 0
    %725 = vmatpush1.bf16.msra.mxu0 %v540
    %726 = vmatprep.subr.bf16.mxu0 0
    %727 = vmatpush1.bf16.msra.mxu0 %v541
    %728 = vmatprep.subr.bf16.mxu0 0
    %729 = vmatpush1.bf16.msra.mxu0 %v542
    %730 = vmatprep.subr.bf16.mxu0 0
    %731 = vmatpush1.bf16.msra.mxu0 %v543
    %732 = vmatprep.subr.bf16.mxu0 0
    %733 = vmatpush1.bf16.msra.mxu0 %v544
    %734 = vmatprep.subr.bf16.mxu0 0
    %735 = vmatpush1.bf16.msra.mxu0 %v545
    %736 = vmatprep.subr.bf16.mxu0 0
    %737 = vmatpush1.bf16.msra.mxu0 %v546
    %738 = vmatprep.subr.bf16.mxu0 0
    %739 = vmatpush1.bf16.msra.mxu0 %v547
    %740 = vmatprep.subr.bf16.mxu0 0
    %741 = vmatpush1.bf16.msra.mxu0 %v548
    %742 = vmatprep.subr.bf16.mxu0 0
    %743 = vmatpush1.bf16.msra.mxu0 %v549
    %744 = vmatprep.mubr.bf16.mxu0 %v235
    %745 = vmatmul.mubr.bf16.gmra.mrb[0].mxu0 %v234
    %v746 = vpop.f32.mrb[0].mxu0
    %v747 = vadd.f32 %v706, %v746
    %v748 = vpop.f32.mrb[0].mxu0
    %v749 = vpop.f32.mrb[0].mxu0
    %v750 = vadd.f32 %v709, %v749
    %v751 = vpop.f32.mrb[0].mxu0
    %752 = vdwg.mxu0
    %753 = vmatprep.subr.bf16.mxu0 0
    %754 = vmatpush1.bf16.msra.mxu0 %v550
    %755 = vmatprep.subr.bf16.mxu0 0
    %756 = vmatpush1.bf16.msra.mxu0 %v551
    %757 = vmatprep.subr.bf16.mxu0 0
    %758 = vmatpush1.bf16.msra.mxu0 %v552
    %759 = vmatprep.subr.bf16.mxu0 0
    %760 = vmatpush1.bf16.msra.mxu0 %v553
    %761 = vmatprep.subr.bf16.mxu0 0
    %762 = vmatpush1.bf16.msra.mxu0 %v554
    %763 = vmatprep.subr.bf16.mxu0 0
    %764 = vmatpush1.bf16.msra.mxu0 %v555
    %765 = vmatprep.subr.bf16.mxu0 0
    %766 = vmatpush1.bf16.msra.mxu0 %v556
    %767 = vmatprep.subr.bf16.mxu0 0
    %768 = vmatpush1.bf16.msra.mxu0 %v557
    %769 = vmatprep.subr.bf16.mxu0 0
    %770 = vmatpush1.bf16.msra.mxu0 %v558
    %771 = vmatprep.subr.bf16.mxu0 0
    %772 = vmatpush1.bf16.msra.mxu0 %v559
    %773 = vmatprep.subr.bf16.mxu0 0
    %774 = vmatpush1.bf16.msra.mxu0 %v560
    %775 = vmatprep.subr.bf16.mxu0 0
    %776 = vmatpush1.bf16.msra.mxu0 %v561
    %777 = vmatprep.subr.bf16.mxu0 0
    %778 = vmatpush1.bf16.msra.mxu0 %v562
    %779 = vmatprep.subr.bf16.mxu0 0
    %780 = vmatpush1.bf16.msra.mxu0 %v563
    %781 = vmatprep.subr.bf16.mxu0 0
    %782 = vmatpush1.bf16.msra.mxu0 %v564
    %783 = vmatprep.subr.bf16.mxu0 0
    %784 = vmatpush1.bf16.msra.mxu0 %v565
    %785 = vmatprep.mubr.bf16.mxu0 %v237
    %786 = vmatmul.mubr.bf16.gmra.mrb[0].mxu0 %v236
    %v787 = vpop.f32.mrb[0].mxu0
    %v788 = vadd.f32 %v747, %v787
    %v789 = vpop.f32.mrb[0].mxu0
    %v790 = vpop.f32.mrb[0].mxu0
    %v791 = vadd.f32 %v750, %v790
    %v792 = vpop.f32.mrb[0].mxu0
    %793 = vdwg.mxu0
    %v794 = vadd.f32 %v76, %v788
    %v795 = vadd.f32 %v77, %v791
    %796 = vst [vmem:[#allocation2] sm:$0xff] %v794
    %797 = vst [vmem:[#allocation2 + $0x8] sm:$0xff] %v795
    // Predicated region
    $region30: #{tpu_custom_call.1} parent=1 // pred_check
      %p798 = pneg %p57
    $region31: #{tpu_custom_call.1} parent=1 // pred_check_branch
      %800 = sbr.rel (%p798) target = $region33
    $region32: #{tpu_custom_call.1} parent=1 // pred_region
      %v801 = vld [vmem:[#allocation2] sm:$0xff]
      %v802 = vld [vmem:[#allocation2 + $0x8] sm:$0xff]
      %v803 = vmul.f32 %v801, %v801
      %v804 = vmul.f32 %v802, %v802
      %805 = vadd.xlane.f32.xlu0 %v803
      %v806 = vpop.xlane.xlu0 %805
      %807 = vadd.xlane.f32.xlu0 %v804
      %v808 = vpop.xlane.xlu0 %807
      %v809 = vadd.f32 %v806, 1e-12
      %v810 = vadd.f32 %v808, 1e-12
      %v811 = vrsqrt.pop %v809
      %v812 = vrsqrt.pop %v810
      %v813 = vmul.f32 %v801, %v811
      %v814 = vmul.f32 %v802, %v812
      %v815 = vpack.c.bf16 %v814, %v813
      %v816 = vld [vmem:[#allocation8] sm:$0xf]
      %v817 = vld [vmem:[#allocation8 + $0x4] sm:$0xf]
      %v818 = vld [vmem:[#allocation8 + $0x8] sm:$0xf]
      %v819 = vld [vmem:[#allocation8 + $0xc] sm:$0xf]
      %v820 = vld [vmem:[#allocation8 + $0x10] sm:$0xf]
      %v821 = vld [vmem:[#allocation8 + $0x14] sm:$0xf]
      %v822 = vld [vmem:[#allocation8 + $0x18] sm:$0xf]
      %v823 = vld [vmem:[#allocation8 + $0x1c] sm:$0xf]
      %v824 = vld [vmem:[#allocation8 + $0x20] sm:$0xf]
      %v825 = vld [vmem:[#allocation8 + $0x24] sm:$0xf]
      %v826 = vld [vmem:[#allocation8 + $0x28] sm:$0xf]
      %v827 = vld [vmem:[#allocation8 + $0x2c] sm:$0xf]
      %v828 = vld [vmem:[#allocation8 + $0x30] sm:$0xf]
      %v829 = vld [vmem:[#allocation8 + $0x34] sm:$0xf]
      %v830 = vld [vmem:[#allocation8 + $0x38] sm:$0xf]
      %v831 = vld [vmem:[#allocation8 + $0x3c] sm:$0xf]
      %v848 = vunpack.c.l.b16 %v816
      %v849 = vunpack.c.l.b16 %v817
      %v850 = vunpack.c.l.b16 %v818
      %v851 = vunpack.c.l.b16 %v819
      %v852 = vunpack.c.l.b16 %v820
      %v853 = vunpack.c.l.b16 %v821
      %v854 = vunpack.c.l.b16 %v822
      %v855 = vunpack.c.l.b16 %v823
      %v856 = vunpack.c.l.b16 %v824
      %v857 = vunpack.c.l.b16 %v825
      %v858 = vunpack.c.l.b16 %v826
      %v859 = vunpack.c.l.b16 %v827
      %v860 = vunpack.c.l.b16 %v828
      %v861 = vunpack.c.l.b16 %v829
      %v862 = vunpack.c.l.b16 %v830
      %v863 = vunpack.c.l.b16 %v831
      %v864 = vpack.c.b16 %v849, %v848
      %v865 = vpack.c.b16 %v851, %v850
      %v866 = vpack.c.b16 %v853, %v852
      %v867 = vpack.c.b16 %v855, %v854
      %v868 = vpack.c.b16 %v857, %v856
      %v869 = vpack.c.b16 %v859, %v858
      %v870 = vpack.c.b16 %v861, %v860
      %v871 = vpack.c.b16 %v863, %v862
      %880 = vmatprep.subr.bf16.mxu0 0
      %881 = vmatpush1.bf16.msra.mxu0 %v864
      %882 = vmatprep.subr.bf16.mxu0 0
      %883 = vmatpush1.bf16.msra.mxu0 %v865
      %884 = vmatprep.subr.bf16.mxu0 0
      %885 = vmatpush1.bf16.msra.mxu0 %v866
      %886 = vmatprep.subr.bf16.mxu0 0
      %887 = vmatpush1.bf16.msra.mxu0 %v867
      %888 = vmatprep.subr.bf16.mxu0 0
      %889 = vmatpush1.bf16.msra.mxu0 %v868
      %890 = vmatprep.subr.bf16.mxu0 0
      %891 = vmatpush1.bf16.msra.mxu0 %v869
      %892 = vmatprep.subr.bf16.mxu0 0
      %893 = vmatpush1.bf16.msra.mxu0 %v870
      %894 = vmatprep.subr.bf16.mxu0 0
      %895 = vmatpush1.bf16.msra.mxu0 %v871
      %896 = vmatprep.subr.bf16.mxu0 0
      %897 = vmatpush1.bf16.msra.mxu0 0
      %898 = vmatprep.subr.bf16.mxu0 0
      %899 = vmatpush1.bf16.msra.mxu0 0
      %900 = vmatprep.subr.bf16.mxu0 0
      %901 = vmatpush1.bf16.msra.mxu0 0
      %902 = vmatprep.subr.bf16.mxu0 0
      %903 = vmatpush1.bf16.msra.mxu0 0
      %904 = vmatprep.subr.bf16.mxu0 0
      %905 = vmatpush1.bf16.msra.mxu0 0
      %906 = vmatprep.subr.bf16.mxu0 0
      %907 = vmatpush1.bf16.msra.mxu0 0
      %908 = vmatprep.subr.bf16.mxu0 0
      %909 = vmatpush1.bf16.msra.mxu0 0
      %910 = vmatprep.subr.bf16.mxu0 0
      %911 = vmatpush1.bf16.msra.mxu0 0
      %912 = vmatprep.mubr.bf16.mxu0 0
      %913 = vmatmul.mubr.bf16.gmra.mrb[0].mxu0 %v815
      %v914 = vpop.f32.mrb[0].mxu0
      %v915 = vadd.f32 0.0, %v914
      %v916 = vpop.f32.mrb[0].mxu0
      %v917 = vpop.f32.mrb[0].mxu0
      %v918 = vadd.f32 0.0, %v917
      %v919 = vpop.f32.mrb[0].mxu0
      %920 = vdwg.mxu0
      %921 = vst [vmem:[#allocation9] sm:$0xff] %v915
      %922 = vst [vmem:[#allocation9 + $0x8] sm:$0xff] %v918
    $region33: #{tpu_custom_call.1} parent=1 // pred_fallthru
      _
    // Predicated region
    $region34: #{tpu_custom_call.1} parent=1 // pred_check
      _
    $region35: #{tpu_custom_call.1} parent=1 // pred_check_branch
      %924 = sbr.rel (0) target = $region37
    $region36: #{tpu_custom_call.1} parent=1 // pred_region
      %s926 = ssub.s32 256, 256
      %927 = vsyncadd [#allocation5], %s926
      %s928 = sshll.u32 [#allocation9], 4
      %s929 = int_to_ptr.vmem [resolvable:$true] %s928
      %934 = dma.vmem_to_hbm [thread:$0]  %s929, 256, %s3, [#allocation5], 128, 128, 8
    $region37: #{tpu_custom_call.1} parent=1 // pred_fallthru
      _
    // Predicated region
    $region38: #{tpu_custom_call.1} parent=1 // pred_check
      _
    $region39: #{tpu_custom_call.1} parent=1 // pred_check_branch
      %936 = sbr.rel (0) target = $region41
    $region40: #{tpu_custom_call.1} parent=1 // pred_region
      %937 = dma.done [#allocation5], 256
    $region41: #{tpu_custom_call.1} parent=1 // pred_fallthru
      _
    %938 = vsyncpa [#allocation4], 1
    %939 = vsyncpa [#allocation7], 1
    %940 = vsyncpa [#allocation5], 1

</llo_original>
